<compile_context>
chip_gen: v5e
topology: v5e:2x2
jax: 0.10.0
libtpu: 0.0.40
codegen_flags: <defaults>
</compile_context>

<pallas_src>
import jax
import jax.numpy as jnp
from jax.experimental import pallas as pl
from jax.experimental.pallas import tpu as pltpu


def _swish_kernel(x_ref, o_ref):
    x = x_ref[...]
    xf = x.astype(jnp.float32)          # f32 math for parity with torch.sigmoid
    o_ref[...] = (xf * jax.nn.sigmoid(xf)).astype(o_ref.dtype)


_LANE = 128
_W_CANDIDATES = (4096, 2048, 1024, 512, 256, 128)


def _sublanes(dtype) -> int:
    # dtype-aware sublane granule: 8 for 32-bit, 16 for 16-bit, 32 for 8-bit
    return {4: 8, 2: 16, 1: 32}.get(jnp.dtype(dtype).itemsize, 8)


def swish(x: jax.Array, *, block_bytes: int = 4 * 1024 * 1024,
          donate_input: bool = False) -> jax.Array:
    """Elementwise Swish/SiLU via Pallas (floating dtypes only)."""
    if not jnp.issubdtype(x.dtype, jnp.floating):
        raise TypeError(f"swish expects a floating dtype, got {x.dtype}")

    orig_shape = x.shape
    dtype = x.dtype
    n = x.size
    if n == 0:
        return x

    itemsize = jnp.dtype(dtype).itemsize
    sub = _sublanes(dtype)

    x_flat = x.reshape(-1)                       # free for contiguous arrays
    n_main = (n // _LANE) * _LANE                # lane-aligned main part

    if n_main == 0:
        # tiny (<128 elements): not worth a kernel launch
        xf = x_flat.astype(jnp.float32)
        return (xf * jax.nn.sigmoid(xf)).astype(dtype).reshape(orig_shape)

    # ---- main, lane-aligned part: Pallas kernel -----------------------------
    x_main = x_flat if n_main == n else x_flat[:n_main]

    # Slab width: widest multiple of 128 dividing n_main, preferring widths
    # that leave at least one full sublane group of rows. 128 always divides
    # n_main, so the fallback loop always succeeds.
    W = None
    for cand in _W_CANDIDATES:
        if n_main % cand == 0 and (n_main // cand) >= sub:
            W = cand
            break
    if W is None:
        for cand in _W_CANDIDATES:
            if n_main % cand == 0:
                W = cand
                break
    rows = n_main // W
    x2d = x_main.reshape(rows, W)

    # Rows per block: ~block_bytes per input block, multiple of the sublane
    # granule. cdiv gridding handles a partial final block, so there is no
    # shape-dependent tile-size cliff. Double-buffered in+out uses at most
    # 4 x block_bytes = 16 MiB of VMEM, safe on v5e/v6e/v7x.
    tr = max(block_bytes // (W * itemsize), sub)
    tr = (tr // sub) * sub
    if tr >= rows:
        tr = rows                                # single full-extent block
    grid = (pl.cdiv(rows, tr),)

    out2d = pl.pallas_call(
        _swish_kernel,
        out_shape=jax.ShapeDtypeStruct((rows, W), dtype),
        grid_spec=pltpu.PrefetchScalarGridSpec(
            num_scalar_prefetch=0,
            grid=grid,
            in_specs=[pl.BlockSpec((tr, W), lambda i: (i, 0))],
            out_specs=pl.BlockSpec((tr, W), lambda i: (i, 0)),
        ),
        compiler_params=pltpu.CompilerParams(
            dimension_semantics=("parallel",),    # shards grid across TCs (v7x)
            vmem_limit_bytes=32 * 1024 * 1024,    # safe on v5e/v6e/v7x
        ),
        input_output_aliases=({0: 0} if donate_input else {}),
    )(x2d)

    if n_main == n:
        return out2d.reshape(orig_shape)

    # ---- tiny tail (< 128 elements, only for non-128-aligned sizes) ---------
    tail = x_flat[n_main:]
    tf = tail.astype(jnp.float32)
    y_tail = (tf * jax.nn.sigmoid(tf)).astype(dtype)
    return jnp.concatenate([out2d.reshape(-1), y_tail]).reshape(orig_shape)


if __name__ == "__main__":
    key = jax.random.PRNGKey(0)
    x = jax.random.normal(key, (2, 4, 16, 16), dtype=jnp.float32)  # NCHW

    y = jax.block_until_ready(swish(x))
    y_ref = x * jax.nn.sigmoid(x)
    assert y.shape == x.shape and y.dtype == x.dtype
    assert jnp.allclose(y, y_ref, atol=1e-6, rtol=1e-6)

    # odd-sized input exercises the non-aligned (tail) path
    x2 = jax.random.normal(jax.random.PRNGKey(1), (3, 5, 7, 11), dtype=jnp.float32)
    y2 = jax.block_until_ready(swish(x2))
    y2_ref = x2 * jax.nn.sigmoid(x2)
    assert y2.shape == x2.shape and y2.dtype == x2.dtype
    assert jnp.allclose(y2, y2_ref, atol=1e-6, rtol=1e-6)

    # bf16 path (16-sublane granule)
    x3 = jax.random.normal(jax.random.PRNGKey(2), (4, 8, 32), dtype=jnp.bfloat16)
    y3 = jax.block_until_ready(swish(x3))
    x3f = x3.astype(jnp.float32)
    y3_ref = (x3f * jax.nn.sigmoid(x3f)).astype(jnp.bfloat16)
    assert y3.shape == x3.shape and y3.dtype == x3.dtype
    assert jnp.allclose(y3.astype(jnp.float32), y3_ref.astype(jnp.float32),
                        atol=1e-2, rtol=1e-2)

    print("KERNEL_OK")
</pallas_src>

<mosaic_0001>
module attributes {stable_mosaic.version = 11 : i64} {
  func.func @_swish_kernel(%arg0: i32, %arg1: memref<8x256xf32, #tpu.memory_space<vmem>>, %arg2: memref<8x256xf32, #tpu.memory_space<vmem>>) attributes {dimension_semantics = [#tpu.dimension_semantics<parallel>], iteration_bounds = array<i64: 1>, scalar_prefetch = 0 : i64, scratch_operands = 0 : i64, tpu.core_type = #tpu.core_type<tc>, window_params = [{transform_indices = @transform_0, window_bounds = array<i64: 8, 256>}, {transform_indices = @transform_1, window_bounds = array<i64: 8, 256>}]} {
    %c0 = arith.constant 0 : index
    %c0_0 = arith.constant 0 : index
    %0 = vector.load %arg1[%c0, %c0_0] : memref<8x256xf32, #tpu.memory_space<vmem>>, vector<8x256xf32>
    %1 = arith.negf %0 : vector<8x256xf32>
    %2 = math.exp %1 : vector<8x256xf32>
    %cst = arith.constant 1.000000e+00 : f32
    %3 = vector.broadcast %cst : f32 to vector<8x256xf32>
    %4 = arith.addf %3, %2 : vector<8x256xf32>
    %5 = arith.divf %3, %4 : vector<8x256xf32>
    %6 = arith.mulf %0, %5 : vector<8x256xf32>
    %c0_1 = arith.constant 0 : index
    %c0_2 = arith.constant 0 : index
    %7 = vector.load %arg2[%c0_1, %c0_2] : memref<8x256xf32, #tpu.memory_space<vmem>>, vector<8x256xf32>
    tpu.vector_store %arg2[%c0_1, %c0_2], %6 {strides = array<i32>} : memref<8x256xf32, #tpu.memory_space<vmem>>, vector<8x256xf32>,
    return
  }
  func.func @transform_0(%arg0: i32) -> (i32, i32) {
    %c0_i32 = arith.constant 0 : i32
    %c0_i32_0 = arith.constant 0 : i32
    return %arg0, %c0_i32 : i32, i32
  }
  func.func @transform_1(%arg0: i32) -> (i32, i32) {
    %c0_i32 = arith.constant 0 : i32
    %c0_i32_0 = arith.constant 0 : i32
    return %arg0, %c0_i32 : i32, i32
  }
}

</mosaic_0001>

<llo_original>
// kernel: tpu_custom_call.1
$region0: #{tpu_custom_call.1}
  #allocation0 [shape = 'u32[]', space=smem, size = 0x4, offset = 0x4, fixed_abs, tag = 'smem constant byte address 0x4 - core index']
  #allocation1 [shape = 'u32[72,128]{1,0:T(1,128)}', space=vmem, size = 0x9000, scoped, tag = 'internal scratch']
  %s0 = inlined_call_operand.hbm [shape: f32[8,256], index: 0, kind: input, shape index: {}]
  %s1 = inlined_call_operand.hbm [shape: f32[8,256], index: 1, kind: output, shape index: {}]
  %s2 = sld [smem:[#allocation0]]
  $region18: #{tpu_custom_call.1} parent=0
    _
  %s4 = ssub.s32 1, %s2
  %s5 = scalar_select 0, %s4, %s2
  $region1: #{tpu_custom_call.1} parent=0
    #allocation2 [shape = 'u8[8192]{0}', space=vmem, size = 0x2000, scoped, tag = 'input window, operand 0, single buffered']
    #allocation3 [shape = 's32[1]{0}', space=sflag, size = 0x4, scoped, tag = 'scoped memory for tpu_custom_call.1']
    #allocation4 [shape = 's32[1]{0}', space=sflag, size = 0x4, scoped, tag = 'scoped memory for tpu_custom_call.1']
    #allocation5 [shape = 'u8[8192]{0}', space=vmem, size = 0x2000, scoped, tag = 'output window, operand 0, single buffered']
    %6 = vsyncpa [#allocation3], 0
    %7 = vsyncpa [#allocation4], 0
    // Predicated region
    $region2: #{tpu_custom_call.1} parent=1 // pred_check
      _
    $region3: #{tpu_custom_call.1} parent=1 // pred_check_branch
      %9 = sbr.rel (0) target = $region5
    $region4: #{tpu_custom_call.1} parent=1 // pred_region
      %11 = vsyncadd [#allocation3], 0
      %s13 = sshll.u32 %s0, 4
      %s14 = int_to_ptr.hbm [resolvable:$true] %s13
      %s15 = sshll.u32 [#allocation2], 4
      %s16 = int_to_ptr.vmem [resolvable:$true] %s15
      %18 = dma.hbm_to_vmem [thread:$0]  %s14, 256, %s16, [#allocation3]
    $region5: #{tpu_custom_call.1} parent=1 // pred_fallthru
      _
    // Predicated region
    $region6: #{tpu_custom_call.1} parent=1 // pred_check
      _
    $region7: #{tpu_custom_call.1} parent=1 // pred_check_branch
      %20 = sbr.rel (0) target = $region9
    $region8: #{tpu_custom_call.1} parent=1 // pred_region
      %22 = dma.done [#allocation3], 256
    $region9: #{tpu_custom_call.1} parent=1 // pred_fallthru
      _
    %v23 = vld [vmem:[#allocation2] sm:$0xff]
    %v24 = vld [vmem:[#allocation2 + $0x8] sm:$0xff]
    %v25 = vxor.u32 %v23, 2147483648
    %v26 = vxor.u32 %v24, 2147483648
    %v27 = vmul.f32 %v25, 1.442695
    %v28 = vpow.pop %v27
    %v29 = vmul.f32 %v26, 1.442695
    %v30 = vpow.pop %v29
    %v31 = vadd.f32 %v28, 1.0
    %v32 = vadd.f32 %v30, 1.0
    %v33 = vrcp.pop %v31
    %v34 = vmul.f32 %v31, %v33
    %v35 = vsub.f32 1.0, %v34
    %v36 = vmul.f32 %v33, %v35
    %v37 = vadd.f32 %v33, %v36
    %vm38 = vweird.f32 %v31
    %vm39 = vweird.f32 %v33
    %vm40 = vmor %vm38, %vm39
    %v41 = vsel %vm40, %v33, %v37
    %v42 = vand.u32 2147483647, %v31
    %vm43 = vcmp.eq.f32.partialorder %v42, 8.507059e+37
    %v44 = vand.u32 %v31, 2147483648
    %v45 = vor.u32 1.1754944e-38, %v44
    %v46 = vsel %vm43, %v45, %v41
    %v47 = vmul.f32 1.0, %v46
    %v48 = vrcp.pop %v32
    %v49 = vmul.f32 %v32, %v48
    %v50 = vsub.f32 1.0, %v49
    %v51 = vmul.f32 %v48, %v50
    %v52 = vadd.f32 %v48, %v51
    %vm53 = vweird.f32 %v32
    %vm54 = vweird.f32 %v48
    %vm55 = vmor %vm53, %vm54
    %v56 = vsel %vm55, %v48, %v52
    %v57 = vand.u32 2147483647, %v32
    %vm58 = vcmp.eq.f32.partialorder %v57, 8.507059e+37
    %v59 = vand.u32 %v32, 2147483648
    %v60 = vor.u32 1.1754944e-38, %v59
    %v61 = vsel %vm58, %v60, %v56
    %v62 = vmul.f32 1.0, %v61
    %v63 = vmul.f32 %v23, %v47
    %v64 = vmul.f32 %v24, %v62
    %65 = vst [vmem:[#allocation5] sm:$0xff] %v63
    %66 = vst [vmem:[#allocation5 + $0x8] sm:$0xff] %v64
    // Predicated region
    $region10: #{tpu_custom_call.1} parent=1 // pred_check
      _
    $region11: #{tpu_custom_call.1} parent=1 // pred_check_branch
      %68 = sbr.rel (0) target = $region13
    $region12: #{tpu_custom_call.1} parent=1 // pred_region
      %70 = vsyncadd [#allocation4], 0
      %s72 = sshll.u32 [#allocation5], 4
      %s73 = int_to_ptr.vmem [resolvable:$true] %s72
      %s74 = sshll.u32 %s1, 4
      %s75 = int_to_ptr.hbm [resolvable:$true] %s74
      %77 = dma.vmem_to_hbm [thread:$0]  %s73, 256, %s75, [#allocation4]
    $region13: #{tpu_custom_call.1} parent=1 // pred_fallthru
      _
    // Predicated region
    $region14: #{tpu_custom_call.1} parent=1 // pred_check
      _
    $region15: #{tpu_custom_call.1} parent=1 // pred_check_branch
      %79 = sbr.rel (0) target = $region17
    $region16: #{tpu_custom_call.1} parent=1 // pred_region
      %81 = dma.done [#allocation4], 256
    $region17: #{tpu_custom_call.1} parent=1 // pred_fallthru
      _
    %82 = vsyncpa [#allocation3], 1
    %83 = vsyncpa [#allocation4], 1

</llo_original>
